<compile_context>
chip_gen: v7x
topology: tpu7x:2x2x1
jax: 0.10.0
libtpu: 0.0.40
codegen_flags: <defaults>
</compile_context>

<pallas_src>
import jax
import jax.numpy as jnp
from jax.experimental import pallas as pl
from jax.experimental.pallas import tpu as pltpu

K = 32
K1 = K // 2          # 16 (fc1 width)
K2 = K - K1          # 16 (fc2 width, k even)
OUT = 6              # output width; out tile is (6, TB) (no sublane padding)


def _round_up(n, m):
    return (n + m - 1) // m * m


# ---------------------------------------------------------------------------
# Kernel: one batch tile, batch rides the 128-lane axis.
# ---------------------------------------------------------------------------
def date2vec_kernel(xT_ref, wb2_ref, wbotT_ref, ac_ref, o_ref):
    """xT: (1, TB) | wb2: (K2, 2)=[w2|b2] | wbotT: (OUT, K2) folded tail weights
    ac: (OUT, 2)=[a|c] folded fc1-path coefficient & total bias | o: (OUT, TB)."""
    xT = xT_ref[...]                                        # (1, TB)

    # fc2 + sin as a VPU broadcast FMA (a depth-1 contraction would just waste
    # MXU pipeline fill).
    h = jnp.sin(wb2_ref[:, 0:1] * xT + wb2_ref[:, 1:2])     # (K2, TB)

    # Folded linear tail: one small MXU matmul with a lane-dense output tile.
    out = jnp.dot(wbotT_ref[...], h,
                  preferred_element_type=jnp.float32)       # (OUT, TB)

    # Folded fc1 branch + total bias (pure VPU broadcast ops).
    out = out + ac_ref[:, 0:1] * xT + ac_ref[:, 1:2]
    o_ref[...] = out.astype(o_ref.dtype)


# ---------------------------------------------------------------------------
# One-time parameter folding (hoisted out of the per-call wrapper).
# Exact in eval mode (dropout = identity):
#   y = x @ (W1·W3top·W4·W5) + sin(x·w2 + b2) @ (W3bot·W4·W5)
#       + (b1·W3top·W4·W5 + b3·W4·W5 + b4·W5 + b5)
# ---------------------------------------------------------------------------
def fold_date2vec_params(params):
    w1, b1, w2, b2, w3, b3, w4, b4, w5, b5 = params
    f32 = jnp.float32
    w45 = w4 @ w5                                     # (K1, 6)
    w345 = w3 @ w45                                   # (K, 6)
    wbot = w345[K1:, :]                               # (K2, 6)
    a = w1 @ w345[:K1, :]                             # (1, 6)  coefficient on x
    c = b1 @ w345[:K1, :] + b3 @ w45 + b4 @ w5 + b5   # (1, 6)  total bias

    wbotT = wbot.T.astype(f32)                                # (OUT, K2)
    ac = jnp.concatenate([a.T, c.T], axis=1).astype(f32)      # (OUT, 2)
    wb2 = jnp.concatenate([w2.T, b2.T], axis=1).astype(f32)   # (K2, 2)
    return wb2, wbotT, ac


# ---------------------------------------------------------------------------
# Forward wrappers.
# ---------------------------------------------------------------------------
def date2vec_forward_lane_major(x, folded, *, tb=256 * 1024, min_grid_steps=4,
                                vmem_limit_bytes=32 * 1024 * 1024):
    """x: (B, 1) f32 -> (OUT, B_pad) f32, lane-major (no post-kernel transpose).

    Columns [B:B_pad) are padding (finite garbage); slice if the consumer needs
    exactly B columns.
    """
    assert tb % 128 == 0, "batch tile must be a multiple of 128 lanes"
    wb2, wbotT, ac = folded
    B = x.shape[0]
    f32 = jnp.float32

    # Batch tiling along the lane axis: pad to 128, then pick a tile that
    # (a) fits the VMEM budget (<= tb) and (b) yields >= min_grid_steps steps
    # for large batches so v7x's two TensorCores both get work.
    b128 = _round_up(max(B, 1), 128)
    tb_eff = max(128, min(tb, _round_up(pl.cdiv(b128, min_grid_steps), 128)))
    b_pad = _round_up(b128, tb_eff)

    xcol = x.reshape(-1).astype(f32)
    if B == b_pad:
        xT = xcol.reshape(1, b_pad)
    else:
        xT = jnp.zeros((1, b_pad), f32).at[0, :B].set(xcol)

    grid = (b_pad // tb_eff,)
    const = lambda shape: pl.BlockSpec(shape, lambda i: (0, 0))

    outT = pl.pallas_call(
        date2vec_kernel,
        out_shape=jax.ShapeDtypeStruct((OUT, b_pad), f32),
        grid=grid,
        in_specs=[
            pl.BlockSpec((1, tb_eff), lambda i: (0, i)),   # x tile (lane-tiled)
            const((K2, 2)),                                # packed w2|b2 (resident)
            const((OUT, K2)),                              # folded tail weights
            const((OUT, 2)),                               # packed a|c
        ],
        out_specs=pl.BlockSpec((OUT, tb_eff), lambda i: (0, i)),
        compiler_params=pltpu.CompilerParams(
            dimension_semantics=("parallel",),
            vmem_limit_bytes=vmem_limit_bytes,
        ),
    )(xT, wb2, wbotT, ac)
    return outT


def date2vec_forward(x, folded, **kwargs):
    """PyTorch-layout convenience wrapper: (B, 1) -> (B, 6).

    NOTE: the un-pad + transpose here re-streams the output through HBM; prefer
    `date2vec_forward_lane_major` when the consumer can accept (6, B) directly.
    """
    B = x.shape[0]
    return date2vec_forward_lane_major(x, folded, **kwargs)[:, :B].T


# ---------------------------------------------------------------------------
# Reference & synthetic params.
# ---------------------------------------------------------------------------
def init_params(key):
    """Deterministic synthetic weights, stored as (in_features, out_features)."""
    ks = jax.random.split(key, 10)
    mk = lambda k, shape: (jax.random.normal(k, shape, jnp.float32)
                           * (1.0 / jnp.sqrt(shape[0])))
    w1 = mk(ks[0], (1, K1));    b1 = jax.random.normal(ks[1], (1, K1), jnp.float32) * 0.1
    w2 = mk(ks[2], (1, K2));    b2 = jax.random.normal(ks[3], (1, K2), jnp.float32) * 0.1
    w3 = mk(ks[4], (K, K1));    b3 = jax.random.normal(ks[5], (1, K1), jnp.float32) * 0.1
    w4 = mk(ks[6], (K1, OUT));  b4 = jax.random.normal(ks[7], (1, OUT), jnp.float32) * 0.1
    w5 = mk(ks[8], (OUT, OUT)); b5 = jax.random.normal(ks[9], (1, OUT), jnp.float32) * 0.1
    return (w1, b1, w2, b2, w3, b3, w4, b4, w5, b5)


def date2vec_ref(x, params):
    """Pure-JAX layer-by-layer reference (dropout = identity, eval mode)."""
    w1, b1, w2, b2, w3, b3, w4, b4, w5, b5 = params
    out1 = x @ w1 + b1
    out2 = jnp.sin(x @ w2 + b2)
    out = jnp.concatenate([out1, out2], axis=1)
    out = out @ w3 + b3
    out = out @ w4 + b4
    out = out @ w5 + b5
    return out


if __name__ == "__main__":
    key = jax.random.PRNGKey(0)
    k_x, k_x2, k_p = jax.random.split(key, 3)
    params = init_params(k_p)
    folded = fold_date2vec_params(params)   # one-time folding, outside the hot path

    # Small batch: single-tile grid, lane-major output path (no transpose).
    x = jax.random.normal(k_x, (8, 1), jnp.float32)
    outT = jax.block_until_ready(date2vec_forward_lane_major(x, folded))
    ref = date2vec_ref(x, params)
    assert outT.shape[0] == OUT and outT.shape[1] % 128 == 0, outT.shape
    assert jnp.allclose(outT[:, :8], ref.T, atol=1e-4, rtol=1e-4), \
        "mismatch vs reference (B=8, lane-major)"

    # Non-multiple batch exercising the multi-step pipelined grid + padding path,
    # via the PyTorch-layout convenience wrapper.
    x2 = jax.random.normal(k_x2, (300, 1), jnp.float32)
    out2 = jax.block_until_ready(date2vec_forward(x2, folded, tb=128))
    ref2 = date2vec_ref(x2, params)
    assert out2.shape == (300, OUT), out2.shape
    assert jnp.allclose(out2, ref2, atol=1e-4, rtol=1e-4), \
        "mismatch vs reference (B=300)"

    print("KERNEL_OK")
</pallas_src>

<mosaic_0001>
module attributes {stable_mosaic.version = 11 : i64} {
  func.func @date2vec_kernel(%arg0: i32, %arg1: memref<1x128xf32, #tpu.memory_space<vmem>>, %arg2: memref<16x2xf32, #tpu.memory_space<vmem>>, %arg3: memref<6x16xf32, #tpu.memory_space<vmem>>, %arg4: memref<6x2xf32, #tpu.memory_space<vmem>>, %arg5: memref<6x128xf32, #tpu.memory_space<vmem>>) attributes {dimension_semantics = [#tpu.dimension_semantics<parallel>], iteration_bounds = array<i64: 1>, scalar_prefetch = 0 : i64, scratch_operands = 0 : i64, tpu.core_type = #tpu.core_type<tc>, window_params = [{transform_indices = @transform_0, window_bounds = array<i64: 1, 128>}, {pipeline_mode = #tpu.pipeline_mode<synchronous>, transform_indices = @transform_1, window_bounds = array<i64: 16, 2>}, {pipeline_mode = #tpu.pipeline_mode<synchronous>, transform_indices = @transform_2, window_bounds = array<i64: 6, 16>}, {pipeline_mode = #tpu.pipeline_mode<synchronous>, transform_indices = @transform_3, window_bounds = array<i64: 6, 2>}, {transform_indices = @transform_4, window_bounds = array<i64: 6, 128>}]} {
    %c0 = arith.constant 0 : index
    %c0_0 = arith.constant 0 : index
    %0 = vector.load %arg1[%c0, %c0_0] : memref<1x128xf32, #tpu.memory_space<vmem>>, vector<1x128xf32>
    %c0_1 = arith.constant 0 : index
    %c0_2 = arith.constant 0 : index
    %1 = vector.load %arg2[%c0_1, %c0_2] : memref<16x2xf32, #tpu.memory_space<vmem>>, vector<16x1xf32>
    %2 = vector.broadcast %1 : vector<16x1xf32> to vector<16x128xf32>
    %3 = vector.broadcast %0 : vector<1x128xf32> to vector<16x128xf32>
    %4 = arith.mulf %2, %3 : vector<16x128xf32>
    %c0_3 = arith.constant 0 : index
    %c1 = arith.constant 1 : index
    %5 = vector.load %arg2[%c0_3, %c1] : memref<16x2xf32, #tpu.memory_space<vmem>>, vector<16x1xf32>
    %6 = vector.broadcast %5 : vector<16x1xf32> to vector<16x128xf32>
    %7 = arith.addf %4, %6 : vector<16x128xf32>
    %8 = math.sin %7 : vector<16x128xf32>
    %c0_4 = arith.constant 0 : index
    %c0_5 = arith.constant 0 : index
    %9 = vector.load %arg3[%c0_4, %c0_5] : memref<6x16xf32, #tpu.memory_space<vmem>>, vector<6x16xf32>
    %cst = arith.constant dense<0.000000e+00> : vector<6x128xf32>
    %10 = tpu.matmul %9, %8, %cst {dimension_numbers = #tpu.dot_dimension_numbers<[1], [0], [0], [1], [0, 0, 1, 1], [], []>} : vector<6x16xf32>, vector<16x128xf32>, vector<6x128xf32> -> vector<6x128xf32>
    %c0_6 = arith.constant 0 : index
    %c0_7 = arith.constant 0 : index
    %11 = vector.load %arg4[%c0_6, %c0_7] : memref<6x2xf32, #tpu.memory_space<vmem>>, vector<6x1xf32>
    %12 = vector.broadcast %11 : vector<6x1xf32> to vector<6x128xf32>
    %13 = vector.broadcast %0 : vector<1x128xf32> to vector<6x128xf32>
    %14 = arith.mulf %12, %13 : vector<6x128xf32>
    %15 = arith.addf %10, %14 : vector<6x128xf32>
    %c0_8 = arith.constant 0 : index
    %c1_9 = arith.constant 1 : index
    %16 = vector.load %arg4[%c0_8, %c1_9] : memref<6x2xf32, #tpu.memory_space<vmem>>, vector<6x1xf32>
    %17 = vector.broadcast %16 : vector<6x1xf32> to vector<6x128xf32>
    %18 = arith.addf %15, %17 : vector<6x128xf32>
    %c0_10 = arith.constant 0 : index
    %c0_11 = arith.constant 0 : index
    %19 = vector.load %arg5[%c0_10, %c0_11] : memref<6x128xf32, #tpu.memory_space<vmem>>, vector<6x128xf32>
    tpu.vector_store %arg5[%c0_10, %c0_11], %18 {strides = array<i32>} : memref<6x128xf32, #tpu.memory_space<vmem>>, vector<6x128xf32>,
    return
  }
  func.func @transform_0(%arg0: i32) -> (i32, i32) {
    %c0_i32 = arith.constant 0 : i32
    %c0_i32_0 = arith.constant 0 : i32
    return %c0_i32, %arg0 : i32, i32
  }
  func.func @transform_1(%arg0: i32) -> (i32, i32) {
    %c0_i32 = arith.constant 0 : i32
    %c0_i32_0 = arith.constant 0 : i32
    %c0_i32_1 = arith.constant 0 : i32
    return %c0_i32, %c0_i32_0 : i32, i32
  }
  func.func @transform_2(%arg0: i32) -> (i32, i32) {
    %c0_i32 = arith.constant 0 : i32
    %c0_i32_0 = arith.constant 0 : i32
    %c0_i32_1 = arith.constant 0 : i32
    return %c0_i32, %c0_i32_0 : i32, i32
  }
  func.func @transform_3(%arg0: i32) -> (i32, i32) {
    %c0_i32 = arith.constant 0 : i32
    %c0_i32_0 = arith.constant 0 : i32
    %c0_i32_1 = arith.constant 0 : i32
    return %c0_i32, %c0_i32_0 : i32, i32
  }
  func.func @transform_4(%arg0: i32) -> (i32, i32) {
    %c0_i32 = arith.constant 0 : i32
    %c0_i32_0 = arith.constant 0 : i32
    return %c0_i32, %arg0 : i32, i32
  }
}

</mosaic_0001>

<llo_original>
// kernel: tpu_custom_call.1
$region0: #{tpu_custom_call.1}
  #allocation0 [shape = 'u32[]', space=smem, size = 0x4, offset = 0x4, fixed_abs, tag = 'smem constant byte address 0x4 - core index']
  #allocation1 [shape = 'u32[144,128]{1,0:T(1,128)}', space=vmem, size = 0x12000, scoped, tag = 'internal scratch']
  %s0 = inlined_call_operand.vmem [shape: f32[1,128], index: 0, kind: input, shape index: {}]
  %s1 = inlined_call_operand.vmem [shape: f32[16,2], index: 1, kind: input, shape index: {}]
  %s2 = inlined_call_operand.vmem [shape: f32[6,16], index: 2, kind: input, shape index: {}]
  %s3 = inlined_call_operand.vmem [shape: f32[6,2], index: 3, kind: input, shape index: {}]
  %s4 = inlined_call_operand.hbm [shape: f32[6,128], index: 4, kind: output, shape index: {}]
  %s5 = sld [smem:[#allocation0]]
  $region26: #{tpu_custom_call.1} parent=0
    _
  %s7 = ssub.s32 1, %s5
  %s8 = scalar_select 0, %s7, %s5
  $region1: #{tpu_custom_call.1} parent=0
    #allocation2 [shape = 'u8[4096]{0}', space=vmem, size = 0x1000, scoped, tag = 'output window, operand 0, single buffered']
    #allocation3 [shape = 's32[1]{0}', space=sflag, size = 0x4, scoped, tag = 'scoped memory for tpu_custom_call.1']
    %9 = vsyncpa [#allocation3], 0
    // Predicated region
    $region2: #{tpu_custom_call.1} parent=1 // pred_check
      _
    $region3: #{tpu_custom_call.1} parent=1 // pred_check_branch
      %11 = sbr.rel (0) target = $region5
    $region4: #{tpu_custom_call.1} parent=1 // pred_region
      _
    $region5: #{tpu_custom_call.1} parent=1 // pred_fallthru
      _
    // Predicated region
    $region6: #{tpu_custom_call.1} parent=1 // pred_check
      _
    $region7: #{tpu_custom_call.1} parent=1 // pred_check_branch
      %13 = sbr.rel (0) target = $region9
    $region8: #{tpu_custom_call.1} parent=1 // pred_region
      _
    $region9: #{tpu_custom_call.1} parent=1 // pred_fallthru
      _
    // Predicated region
    $region10: #{tpu_custom_call.1} parent=1 // pred_check
      _
    $region11: #{tpu_custom_call.1} parent=1 // pred_check_branch
      %15 = sbr.rel (0) target = $region13
    $region12: #{tpu_custom_call.1} parent=1 // pred_region
      _
    $region13: #{tpu_custom_call.1} parent=1 // pred_fallthru
      _
    // Predicated region
    $region14: #{tpu_custom_call.1} parent=1 // pred_check
      _
    $region15: #{tpu_custom_call.1} parent=1 // pred_check_branch
      %17 = sbr.rel (0) target = $region17
    $region16: #{tpu_custom_call.1} parent=1 // pred_region
      _
    $region17: #{tpu_custom_call.1} parent=1 // pred_fallthru
      _
    %v18 = vld [vmem:[%s0] sm:$0x1]
    %v19 = vld [vmem:[%s1] sm:$0xff]
    %v20 = vld [vmem:[%s1 + $0x8] sm:$0xff]
    %22 = vset.pattern.permute.xlu0 0
    %23 = vperm.xlu0 %22, %v19
    %v24 = vpop.permute.xlu0 %23
    %27 = vset.pattern.permute.xlu0 0
    %28 = vperm.xlu0 %27, %v20
    %v29 = vpop.permute.xlu0 %28
    %v32 = vlaneseq
    %v33 = vshrl.u32 %v32, 7
    %v34 = vsub.s32 0, %v33
    %v35 = vrot.slane %v18, %v34
    %v37 = vmul.f32 %v24, %v35
    %v38 = vmul.f32 %v29, %v35
    %39 = vset.pattern.permute.xlu0 1
    %40 = vperm.xlu0 %39, %v19
    %v41 = vpop.permute.xlu0 %40
    %43 = vset.pattern.permute.xlu0 1
    %44 = vperm.xlu0 %43, %v20
    %v45 = vpop.permute.xlu0 %44
    %v47 = vadd.f32 %v37, %v41
    %v48 = vadd.f32 %v38, %v45
    %v49 = vand.u32 2147483647, %v47
    %vm50 = vcmp.le.f32.partialorder %v49, 0.7853982
    %vm51 = vcmp.lt.s32.totalorder %v47, 0
    %v52 = vand.u32 %v47, 2139095040
    %v53 = vshrl.u32 %v52, 23
    %v54 = vsub.s32 %v53, 127
    %v55 = vand.u32 2147483647, %v47
    %v56 = vand.u32 %v55, 8388607
    %v57 = vor.u32 %v56, 8388608
    %v58 = vsub.s32 0, %v57
    %v59 = vadd.s32 %v54, 1
    %vm60 = vcmp.gt.s32.totalorder %v59, 0
    %v61 = vsel %vm60, %v59, 0
    %v62 = vshrl.u32 %v61, 5
    %v63 = vand.u32 %v61, 31
    %v64 = vsub.s32 32, %v63
    %v65 = vshrl.u32 683565275, %v64
    %v66 = vshll.u32 683565275, %v63
    %v67 = vshrl.u32 2475754826, %v64
    %v68 = vor.u32 %v66, %v67
    %v69 = vshll.u32 2475754826, %v63
    %v70 = vshrl.u32 2131351028, %v64
    %v71 = vor.u32 %v69, %v70
    %v72 = vshll.u32 2131351028, %v63
    %v73 = vshrl.u32 2102212464, %v64
    %v74 = vor.u32 %v72, %v73
    %v75 = vshll.u32 2102212464, %v63
    %v76 = vshrl.u32 920167782, %v64
    %v77 = vor.u32 %v75, %v76
    %v78 = vshll.u32 920167782, %v63
    %v79 = vshrl.u32 1326507024, %v64
    %v80 = vor.u32 %v78, %v79
    %vm81 = vcmp.lt.s32.totalorder %v62, 1
    %vm82 = vcmp.lt.s32.totalorder %v62, 2
    %vm83 = vcmp.lt.s32.totalorder %v62, 3
    %vm84 = vcmp.lt.s32.totalorder %v62, 4
    %v85 = vsel %vm81, %v65, %v68
    %v86 = vsel %vm84, %v74, 2102212464
    %v87 = vsel %vm83, %v71, %v86
    %v88 = vsel %vm82, %v85, %v87
    %v89 = vsel %vm81, %v68, %v71
    %v90 = vsel %vm84, %v77, 920167782
    %v91 = vsel %vm83, %v74, %v90
    %v92 = vsel %vm82, %v89, %v91
    %v93 = vsel %vm81, %v71, %v74
    %v94 = vsel %vm84, %v80, 1326507024
    %v95 = vsel %vm83, %v77, %v94
    %v96 = vsel %vm82, %v93, %v95
    %v97 = vshll.u32 %v57, 8
    %v98 = vmul.u32.u64.compose %v97, %v96
    %v99 = vextract.low.u32 %v98
    %v100 = vextract.high.u32 %v98
    %v101 = vmul.u32.u64.compose %v97, %v92
    %v102 = vextract.low.u32 %v101
    %v103 = vextract.high.u32 %v101
    %v104 = vmul.u32 %v97, %v88
    %v105 = vadd.s32 %v100, %v102
    %vm106 = vc.u32 %v100, %v102
    %v107 = vadd.s32 %v103, 1
    %v108 = vsel %vm106, %v107, %v103
    %v109 = vadd.s32 %v104, %v108
    %v110 = vadd.s32 %v109, 536870912
    %v111 = vshrl.u32 %v110, 30
    %v112 = vshll.u32 %v111, 30
    %v113 = vsub.s32 %v109, %v112
    %vm114 = vcmp.lt.s32.totalorder %v113, 0
    %v115 = vsub.s32 0, %v113
    %v116 = vsel %vm114, %v115, %v113
    %v117 = vclz %v116
    %v118 = vsub.s32 %v117, 2
    %vm119 = vcmp.gt.s32.totalorder 0, %v118
    %v120 = vsel %vm119, 0, %v118
    %v121 = vsub.s32 32, %v120
    %v122 = vshll.u32 %v113, %v120
    %v123 = vshrl.u32 %v105, %v121
    %v124 = vor.u32 %v122, %v123
    %v125 = vsub.s32 4294967266, %v120
    %v126 = vadd.s32 %v125, 127
    %v127 = vshll.u32 %v126, 23
    %v128 = vor.u32 4788187, %v127
    %v129 = vand.u32 2147483647, %v128
    %v131 = vcvt.s32.f32 %v124
    %v132 = vmul.f32 %v131, %v129
    %v133 = vxor.u32 %v132, 2147483648
    %v134 = vsel %vm51, %v133, %v132
    %v135 = vsub.s32 4, %v111
    %v136 = vsel %vm51, %v135, %v111
    %v137 = vsel %vm50, %v47, %v134
    %v138 = vsel %vm50, 0, %v136
    %v139 = vcosq.f32.pop %v137
    %v140 = vsinq.f32.pop %v137
    %vm141 = vweird.f32 %v47
    %v142 = vadd.s32 %v138, 3
    %v143 = vand.u32 %v142, 3
    %vm144 = vcmp.lt.s32.totalorder %v143, 2
    %vm145 = vcmp.eq.s32.totalorder %v143, 0
    %v146 = vxor.u32 %v140, 2147483648
    %v147 = vsel %vm145, %v139, %v146
    %vm148 = vcmp.eq.s32.totalorder %v143, 2
    %v149 = vxor.u32 %v139, 2147483648
    %v150 = vsel %vm148, %v149, %v140
    %v151 = vsel %vm144, %v147, %v150
    %v152 = vsel %vm141, nan, %v151
    %v153 = vand.u32 2147483647, %v48
    %vm154 = vcmp.le.f32.partialorder %v153, 0.7853982
    %vm155 = vcmp.lt.s32.totalorder %v48, 0
    %v156 = vand.u32 %v48, 2139095040
    %v157 = vshrl.u32 %v156, 23
    %v158 = vsub.s32 %v157, 127
    %v159 = vand.u32 2147483647, %v48
    %v160 = vand.u32 %v159, 8388607
    %v161 = vor.u32 %v160, 8388608
    %v162 = vsub.s32 0, %v161
    %v163 = vadd.s32 %v158, 1
    %vm164 = vcmp.gt.s32.totalorder %v163, 0
    %v165 = vsel %vm164, %v163, 0
    %v166 = vshrl.u32 %v165, 5
    %v167 = vand.u32 %v165, 31
    %v168 = vsub.s32 32, %v167
    %v169 = vshrl.u32 683565275, %v168
    %v170 = vshll.u32 683565275, %v167
    %v171 = vshrl.u32 2475754826, %v168
    %v172 = vor.u32 %v170, %v171
    %v173 = vshll.u32 2475754826, %v167
    %v174 = vshrl.u32 2131351028, %v168
    %v175 = vor.u32 %v173, %v174
    %v176 = vshll.u32 2131351028, %v167
    %v177 = vshrl.u32 2102212464, %v168
    %v178 = vor.u32 %v176, %v177
    %v179 = vshll.u32 2102212464, %v167
    %v180 = vshrl.u32 920167782, %v168
    %v181 = vor.u32 %v179, %v180
    %v182 = vshll.u32 920167782, %v167
    %v183 = vshrl.u32 1326507024, %v168
    %v184 = vor.u32 %v182, %v183
    %vm185 = vcmp.lt.s32.totalorder %v166, 1
    %vm186 = vcmp.lt.s32.totalorder %v166, 2
    %vm187 = vcmp.lt.s32.totalorder %v166, 3
    %vm188 = vcmp.lt.s32.totalorder %v166, 4
    %v189 = vsel %vm185, %v169, %v172
    %v190 = vsel %vm188, %v178, 2102212464
    %v191 = vsel %vm187, %v175, %v190
    %v192 = vsel %vm186, %v189, %v191
    %v193 = vsel %vm185, %v172, %v175
    %v194 = vsel %vm188, %v181, 920167782
    %v195 = vsel %vm187, %v178, %v194
    %v196 = vsel %vm186, %v193, %v195
    %v197 = vsel %vm185, %v175, %v178
    %v198 = vsel %vm188, %v184, 1326507024
    %v199 = vsel %vm187, %v181, %v198
    %v200 = vsel %vm186, %v197, %v199
    %v201 = vshll.u32 %v161, 8
    %v202 = vmul.u32.u64.compose %v201, %v200
    %v203 = vextract.low.u32 %v202
    %v204 = vextract.high.u32 %v202
    %v205 = vmul.u32.u64.compose %v201, %v196
    %v206 = vextract.low.u32 %v205
    %v207 = vextract.high.u32 %v205
    %v208 = vmul.u32 %v201, %v192
    %v209 = vadd.s32 %v204, %v206
    %vm210 = vc.u32 %v204, %v206
    %v211 = vadd.s32 %v207, 1
    %v212 = vsel %vm210, %v211, %v207
    %v213 = vadd.s32 %v208, %v212
    %v214 = vadd.s32 %v213, 536870912
    %v215 = vshrl.u32 %v214, 30
    %v216 = vshll.u32 %v215, 30
    %v217 = vsub.s32 %v213, %v216
    %vm218 = vcmp.lt.s32.totalorder %v217, 0
    %v219 = vsub.s32 0, %v217
    %v220 = vsel %vm218, %v219, %v217
    %v221 = vclz %v220
    %v222 = vsub.s32 %v221, 2
    %vm223 = vcmp.gt.s32.totalorder 0, %v222
    %v224 = vsel %vm223, 0, %v222
    %v225 = vsub.s32 32, %v224
    %v226 = vshll.u32 %v217, %v224
    %v227 = vshrl.u32 %v209, %v225
    %v228 = vor.u32 %v226, %v227
    %v229 = vsub.s32 4294967266, %v224
    %v230 = vadd.s32 %v229, 127
    %v231 = vshll.u32 %v230, 23
    %v232 = vor.u32 4788187, %v231
    %v233 = vand.u32 2147483647, %v232
    %v235 = vcvt.s32.f32 %v228
    %v236 = vmul.f32 %v235, %v233
    %v237 = vxor.u32 %v236, 2147483648
    %v238 = vsel %vm155, %v237, %v236
    %v239 = vsub.s32 4, %v215
    %v240 = vsel %vm155, %v239, %v215
    %v241 = vsel %vm154, %v48, %v238
    %v242 = vsel %vm154, 0, %v240
    %v243 = vcosq.f32.pop %v241
    %v244 = vsinq.f32.pop %v241
    %vm245 = vweird.f32 %v48
    %v246 = vadd.s32 %v242, 3
    %v247 = vand.u32 %v246, 3
    %vm248 = vcmp.lt.s32.totalorder %v247, 2
    %vm249 = vcmp.eq.s32.totalorder %v247, 0
    %v250 = vxor.u32 %v244, 2147483648
    %v251 = vsel %vm249, %v243, %v250
    %vm252 = vcmp.eq.s32.totalorder %v247, 2
    %v253 = vxor.u32 %v243, 2147483648
    %v254 = vsel %vm252, %v253, %v244
    %v255 = vsel %vm248, %v251, %v254
    %v256 = vsel %vm245, nan, %v255
    %v257 = vld [vmem:[%s2] sm:$0x3f]
    %v258 = vld [vmem:[%s3] sm:$0x3f]
    %260 = vset.pattern.permute.xlu0 0
    %261 = vperm.xlu0 %260, %v258
    %v262 = vpop.permute.xlu0 %261
    %v264 = vmul.f32 %v262, %v35
    %vm265 = vcmask 130048
    %v267 = vsel %vm265, %v257, 0
    %269 = vmatprep.subr.mxu0 0.0
    %270 = vmatpush1.msra.mxu0 %v152
    %271 = vmatprep.subr.mxu0 0.0
    %272 = vmatpush1.msra.mxu0 %v256
    %273 = vmatprep.subr.mxu0 0.0
    %274 = vmatpush1.msra.mxu0 0.0
    %275 = vmatprep.subr.mxu0 0.0
    %276 = vmatpush1.msra.mxu0 0.0
    %277 = vmatprep.subr.mxu0 0.0
    %278 = vmatpush1.msra.mxu0 0.0
    %279 = vmatprep.subr.mxu0 0.0
    %280 = vmatpush1.msra.mxu0 0.0
    %281 = vmatprep.subr.mxu0 0.0
    %282 = vmatpush1.msra.mxu0 0.0
    %283 = vmatprep.subr.mxu0 0.0
    %284 = vmatpush1.msra.mxu0 0.0
    %285 = vmatprep.subr.mxu0 0.0
    %286 = vmatpush1.msra.mxu0 0.0
    %287 = vmatprep.subr.mxu0 0.0
    %288 = vmatpush1.msra.mxu0 0.0
    %289 = vmatprep.subr.mxu0 0.0
    %290 = vmatpush1.msra.mxu0 0.0
    %291 = vmatprep.subr.mxu0 0.0
    %292 = vmatpush1.msra.mxu0 0.0
    %293 = vmatprep.subr.mxu0 0.0
    %294 = vmatpush1.msra.mxu0 0.0
    %295 = vmatprep.subr.mxu0 0.0
    %296 = vmatpush1.msra.mxu0 0.0
    %297 = vmatprep.subr.mxu0 0.0
    %298 = vmatpush1.msra.mxu0 0.0
    %299 = vmatprep.subr.mxu0 0.0
    %300 = vmatpush1.msra.mxu0 0.0
    %301 = vmatprep.subr.mxu0 0.0
    %302 = vmatpush1.msra.mxu0 0.0
    %303 = vmatprep.subr.mxu0 0.0
    %304 = vmatpush1.msra.mxu0 0.0
    %305 = vmatprep.subr.mxu0 0.0
    %306 = vmatpush1.msra.mxu0 0.0
    %307 = vmatprep.subr.mxu0 0.0
    %308 = vmatpush1.msra.mxu0 0.0
    %309 = vmatprep.subr.mxu0 0.0
    %310 = vmatpush1.msra.mxu0 0.0
    %311 = vmatprep.subr.mxu0 0.0
    %312 = vmatpush1.msra.mxu0 0.0
    %313 = vmatprep.subr.mxu0 0.0
    %314 = vmatpush1.msra.mxu0 0.0
    %315 = vmatprep.subr.mxu0 0.0
    %316 = vmatpush1.msra.mxu0 0.0
    %317 = vmatprep.subr.mxu0 0.0
    %318 = vmatpush1.msra.mxu0 0.0
    %319 = vmatprep.subr.mxu0 0.0
    %320 = vmatpush1.msra.mxu0 0.0
    %321 = vmatprep.subr.mxu0 0.0
    %322 = vmatpush1.msra.mxu0 0.0
    %323 = vmatprep.subr.mxu0 0.0
    %324 = vmatpush1.msra.mxu0 0.0
    %325 = vmatprep.subr.mxu0 0.0
    %326 = vmatpush1.msra.mxu0 0.0
    %327 = vmatprep.subr.mxu0 0.0
    %328 = vmatpush1.msra.mxu0 0.0
    %329 = vmatprep.subr.mxu0 0.0
    %330 = vmatpush1.msra.mxu0 0.0
    %331 = vmatprep.subr.mxu0 0.0
    %332 = vmatpush1.msra.mxu0 0.0
    %333 = vmatprep.mubr.f32.mxu0 0.0
    %334 = vmatmul.mubr.f32.gmra.mrb[0].mxu0 %v267
    %v335 = vpop.f32.mrb[0].mxu0
    %v336 = vadd.f32 %v264, %v335
    %v337 = vpop.f32.mrb[0].mxu0
    %338 = vdwg.mxu0
    %339 = vset.pattern.permute.xlu0 1
    %340 = vperm.xlu0 %339, %v258
    %v341 = vpop.permute.xlu0 %340
    %v343 = vadd.f32 %v336, %v341
    %344 = vst [vmem:[#allocation2] sm:$0x3f] %v343
    // Predicated region
    $region18: #{tpu_custom_call.1} parent=1 // pred_check
      _
    $region19: #{tpu_custom_call.1} parent=1 // pred_check_branch
      %346 = sbr.rel (0) target = $region21
    $region20: #{tpu_custom_call.1} parent=1 // pred_region
      %s348 = ssub.s32 128, 128
      %349 = vsyncadd [#allocation3], %s348
      %s351 = sshll.u32 [#allocation2], 4
      %s352 = int_to_ptr.vmem [resolvable:$true] %s351
      %354 = dma.vmem_to_hbm [thread:$0]  %s352, 128, %s4, [#allocation3]
    $region21: #{tpu_custom_call.1} parent=1 // pred_fallthru
      _
    // Predicated region
    $region22: #{tpu_custom_call.1} parent=1 // pred_check
      _
    $region23: #{tpu_custom_call.1} parent=1 // pred_check_branch
      %356 = sbr.rel (0) target = $region25
    $region24: #{tpu_custom_call.1} parent=1 // pred_region
      %357 = dma.done [#allocation3], 128
    $region25: #{tpu_custom_call.1} parent=1 // pred_fallthru
      _
    %358 = vsyncpa [#allocation3], 1

</llo_original>
